<compile_context>
chip_gen: v6e
topology: v6e:2x2x1
jax: 0.10.0
libtpu: 0.0.40
codegen_flags: <defaults>
</compile_context>

<pallas_src>
import functools

import jax
import jax.numpy as jnp
from jax.experimental import pallas as pl
from jax.experimental.pallas import tpu as pltpu

HIDDEN = 256
LANE = 128
SUBLANE = 8
MAX_TB = 2048                       # max batch-tile rows (review: 1024-2048+)
VMEM_LIMIT_BYTES = 32 * 1024 * 1024  # explicit scoped-VMEM budget, safe on all gens


def _round_up(x, m):
    return (x + m - 1) // m * m


def _actor_critic_kernel(x_ref, w1_ref, b1_ref, w2_ref, b2_ref,
                         wh_ref, bh_ref, out_ref):
    # Layer 1: Linear(state_pad -> 256) + ReLU.  bf16 MXU inputs, f32 acc.
    h1 = jnp.dot(x_ref[...], w1_ref[...], preferred_element_type=jnp.float32)
    h1 = jnp.maximum(h1 + b1_ref[...], 0.0)                       # f32 VPU
    # Layer 2: Linear(256 -> 256) + ReLU.
    h2 = jnp.dot(h1.astype(jnp.bfloat16), w2_ref[...],
                 preferred_element_type=jnp.float32)
    h2 = jnp.maximum(h2 + b2_ref[...], 0.0)                       # f32 VPU
    # Fused heads: actor logits (action_dim cols) + critic value (1 col),
    # lane-padded to 128 so the output store is lane-dense.
    out = jnp.dot(h2.astype(jnp.bfloat16), wh_ref[...],
                  preferred_element_type=jnp.float32)
    out_ref[...] = out + bh_ref[...]


def pack_params(params, *, state_dim, action_dim):
    """One-time packing of PyTorch-layout params into kernel layout.

    Weights become (in, out) bf16, state_dim zero-padded to 8 sublanes, actor
    and critic heads fused into one lane-padded (256, 128) matrix.  Biases
    stay f32.  Do this once at init, not per forward call.
    """
    w1, b1, w2, b2, wa, ba, wc, bc = params
    S_pad = _round_up(max(state_dim, SUBLANE), SUBLANE)
    H_out = _round_up(max(action_dim + 1, LANE), LANE)
    f32, bf16 = jnp.float32, jnp.bfloat16

    w1_p = (jnp.zeros((S_pad, HIDDEN), f32)
            .at[:state_dim, :].set(w1.T.astype(f32))).astype(bf16)
    b1_p = b1.reshape(1, HIDDEN).astype(f32)
    w2_p = w2.T.astype(bf16)
    b2_p = b2.reshape(1, HIDDEN).astype(f32)

    wh = jnp.zeros((HIDDEN, H_out), f32)
    wh = wh.at[:, :action_dim].set(wa.T.astype(f32))
    wh = wh.at[:, action_dim:action_dim + 1].set(wc.T.astype(f32))
    wh = wh.astype(bf16)
    bh = jnp.zeros((1, H_out), f32)
    bh = bh.at[0, :action_dim].set(ba.astype(f32))
    bh = bh.at[0, action_dim].set(bc[0].astype(f32))

    return (w1_p, b1_p, w2_p, b2_p, wh, bh)


@functools.partial(jax.jit, static_argnames=("state_dim", "action_dim"))
def actor_critic_forward(x, packed, *, state_dim, action_dim):
    """x: (B, state_dim) f32 -> (logits (B, action_dim) f32, value (B,) f32)."""
    w1_p, b1_p, w2_p, b2_p, wh, bh = packed
    B = x.shape[0]
    S_pad = w1_p.shape[0]
    H_out = wh.shape[1]

    # Batch tiling: big tiles to amortize per-grid-step overhead, but keep
    # >= 2 tiles whenever B permits so v7x's two TensorCores both get work
    # (the grid axis is "parallel"; harmless on single-TC v5e/v6e).
    B8 = _round_up(max(B, SUBLANE), SUBLANE)
    if B8 >= 2 * SUBLANE:
        TB = min(MAX_TB, _round_up(pl.cdiv(B8, 2), SUBLANE))
    else:
        TB = B8
    B_pad = _round_up(B8, TB)
    n_tiles = B_pad // TB

    # Single fusible pad of the (tiny) activation -- no zeros + scatter.
    x_p = jnp.pad(x.astype(jnp.bfloat16),
                  ((0, B_pad - B), (0, S_pad - state_dim)))

    flops = 2 * B_pad * (S_pad * HIDDEN + HIDDEN * HIDDEN + HIDDEN * H_out)
    bytes_accessed = (
        x_p.size * 2 + w1_p.size * 2 + w2_p.size * 2 + wh.size * 2
        + (b1_p.size + b2_p.size + bh.size) * 4 + B_pad * H_out * 4)

    resident = functools.partial(pl.BlockSpec, index_map=lambda i: (0, 0),
                                 pipeline_mode=pl.Buffered(1))

    out = pl.pallas_call(
        _actor_critic_kernel,
        out_shape=jax.ShapeDtypeStruct((B_pad, H_out), jnp.float32),
        grid=(n_tiles,),
        in_specs=[
            pl.BlockSpec((TB, S_pad), lambda i: (i, 0)),   # x tiles stream
            resident((S_pad, HIDDEN)),                     # weights stay
            resident((1, HIDDEN)),                         # resident in VMEM
            resident((HIDDEN, HIDDEN)),                    # (single-buffered)
            resident((1, HIDDEN)),                         # across all
            resident((HIDDEN, H_out)),                     # batch tiles
            resident((1, H_out)),
        ],
        out_specs=pl.BlockSpec((TB, H_out), lambda i: (i, 0)),
        compiler_params=pltpu.CompilerParams(
            dimension_semantics=("parallel",),
            vmem_limit_bytes=VMEM_LIMIT_BYTES),
        cost_estimate=pl.CostEstimate(
            flops=flops, transcendentals=0, bytes_accessed=bytes_accessed),
    )(x_p, w1_p, b1_p, w2_p, b2_p, wh, bh)

    # One slice of the padded slab, then split logits / value from it.
    head = out[:B, :action_dim + 1]
    logits = head[:, :action_dim]
    value = head[:, action_dim]          # == critic(x).squeeze(-1)
    return logits, value


def init_params(key, state_dim, action_dim):
    """Deterministic init mirroring nn.Linear shapes (uniform, like PyTorch)."""
    def linear(key, fan_in, fan_out):
        k1, k2 = jax.random.split(key)
        bound = 1.0 / jnp.sqrt(fan_in)
        w = jax.random.uniform(k1, (fan_out, fan_in), jnp.float32, -bound, bound)
        b = jax.random.uniform(k2, (fan_out,), jnp.float32, -bound, bound)
        return w, b

    k1, k2, k3, k4 = jax.random.split(key, 4)
    w1, b1 = linear(k1, state_dim, HIDDEN)
    w2, b2 = linear(k2, HIDDEN, HIDDEN)
    wa, ba = linear(k3, HIDDEN, action_dim)
    wc, bc = linear(k4, HIDDEN, 1)
    return (w1, b1, w2, b2, wa, ba, wc, bc)


def reference_forward_f32(x, params):
    """Exact f32 semantics of the PyTorch module."""
    w1, b1, w2, b2, wa, ba, wc, bc = params
    h = jnp.maximum(x @ w1.T + b1, 0.0)
    h = jnp.maximum(h @ w2.T + b2, 0.0)
    logits = h @ wa.T + ba
    value = (h @ wc.T + bc)[..., 0]
    return logits, value


def reference_forward_bf16(x, params):
    """Reference matching the kernel's bf16-weight / f32-accumulate numerics."""
    w1, b1, w2, b2, wa, ba, wc, bc = params
    bf = lambda a: a.astype(jnp.bfloat16).astype(jnp.float32)
    hp = jax.lax.Precision.HIGHEST
    xb = bf(x)
    h = jnp.maximum(jnp.dot(xb, bf(w1.T), precision=hp) + b1, 0.0)
    h = jnp.maximum(jnp.dot(bf(h), bf(w2.T), precision=hp) + b2, 0.0)
    logits = jnp.dot(bf(h), bf(wa.T), precision=hp) + ba
    value = (jnp.dot(bf(h), bf(wc.T), precision=hp) + bc)[..., 0]
    return logits, value


if __name__ == "__main__":
    state_dim, action_dim = 4, 2   # CartPole-v1
    key = jax.random.PRNGKey(0)
    k_params, k_x0, k_x1, k_x2 = jax.random.split(key, 4)

    params = init_params(k_params, state_dim, action_dim)
    packed = pack_params(params, state_dim=state_dim, action_dim=action_dim)
    packed = jax.block_until_ready(packed)   # one-time packing cost

    # Small single-tile batch, two-tile batch, and a non-tile-aligned batch.
    for batch, k_x in ((2, k_x0), (8, k_x1), (600, k_x2)):
        x = jax.random.normal(k_x, (batch, state_dim), jnp.float32)
        logits, value = actor_critic_forward(
            x, packed, state_dim=state_dim, action_dim=action_dim)
        jax.block_until_ready((logits, value))

        assert logits.shape == (batch, action_dim)
        assert value.shape == (batch,)

        # Tight check against a bf16-weight reference (same numerics as kernel).
        ref_l_bf, ref_v_bf = reference_forward_bf16(x, params)
        assert jnp.allclose(logits, ref_l_bf, atol=1e-3, rtol=1e-3)
        assert jnp.allclose(value, ref_v_bf, atol=1e-3, rtol=1e-3)

        # Loose check against the exact f32 PyTorch semantics.
        ref_l, ref_v = reference_forward_f32(x, params)
        assert jnp.allclose(logits, ref_l, atol=5e-2, rtol=5e-2)
        assert jnp.allclose(value, ref_v, atol=5e-2, rtol=5e-2)

    print("KERNEL_OK")
</pallas_src>

<mosaic_0001>
module attributes {stable_mosaic.version = 11 : i64} {
  func.func @_actor_critic_kernel(%arg0: i32, %arg1: memref<8x8xbf16, #tpu.memory_space<vmem>>, %arg2: memref<8x256xbf16, #tpu.memory_space<vmem>>, %arg3: memref<1x256xf32, #tpu.memory_space<vmem>>, %arg4: memref<256x256xbf16, #tpu.memory_space<vmem>>, %arg5: memref<1x256xf32, #tpu.memory_space<vmem>>, %arg6: memref<256x128xbf16, #tpu.memory_space<vmem>>, %arg7: memref<1x128xf32, #tpu.memory_space<vmem>>, %arg8: memref<8x128xf32, #tpu.memory_space<vmem>>) attributes {dimension_semantics = [#tpu.dimension_semantics<parallel>], iteration_bounds = array<i64: 1>, scalar_prefetch = 0 : i64, scratch_operands = 0 : i64, tpu.core_type = #tpu.core_type<tc>, window_params = [{transform_indices = @transform_0, window_bounds = array<i64: 8, 8>}, {pipeline_mode = #tpu.pipeline_mode<synchronous>, transform_indices = @transform_1, window_bounds = array<i64: 8, 256>}, {pipeline_mode = #tpu.pipeline_mode<synchronous>, transform_indices = @transform_2, window_bounds = array<i64: 1, 256>}, {pipeline_mode = #tpu.pipeline_mode<synchronous>, transform_indices = @transform_3, window_bounds = array<i64: 256, 256>}, {pipeline_mode = #tpu.pipeline_mode<synchronous>, transform_indices = @transform_4, window_bounds = array<i64: 1, 256>}, {pipeline_mode = #tpu.pipeline_mode<synchronous>, transform_indices = @transform_5, window_bounds = array<i64: 256, 128>}, {pipeline_mode = #tpu.pipeline_mode<synchronous>, transform_indices = @transform_6, window_bounds = array<i64: 1, 128>}, {transform_indices = @transform_7, window_bounds = array<i64: 8, 128>}]} {
    %c0 = arith.constant 0 : index
    %c0_0 = arith.constant 0 : index
    %0 = vector.load %arg1[%c0, %c0_0] : memref<8x8xbf16, #tpu.memory_space<vmem>>, vector<8x8xbf16>
    %c0_1 = arith.constant 0 : index
    %c0_2 = arith.constant 0 : index
    %1 = vector.load %arg2[%c0_1, %c0_2] : memref<8x256xbf16, #tpu.memory_space<vmem>>, vector<8x256xbf16>
    %cst = arith.constant dense<0.000000e+00> : vector<8x256xf32>
    %2 = tpu.matmul %0, %1, %cst {dimension_numbers = #tpu.dot_dimension_numbers<[1], [0], [0], [1], [0, 0, 1, 1], [], []>} : vector<8x8xbf16>, vector<8x256xbf16>, vector<8x256xf32> -> vector<8x256xf32>
    %c0_3 = arith.constant 0 : index
    %c0_4 = arith.constant 0 : index
    %3 = vector.load %arg3[%c0_3, %c0_4] : memref<1x256xf32, #tpu.memory_space<vmem>>, vector<1x256xf32>
    %4 = vector.broadcast %3 : vector<1x256xf32> to vector<8x256xf32>
    %5 = arith.addf %2, %4 : vector<8x256xf32>
    %cst_5 = arith.constant 0.000000e+00 : f32
    %6 = vector.broadcast %cst_5 : f32 to vector<8x256xf32>
    %7 = arith.maximumf %5, %6 : vector<8x256xf32>
    %8 = arith.truncf %7 : vector<8x256xf32> to vector<8x256xbf16>
    %c0_6 = arith.constant 0 : index
    %c0_7 = arith.constant 0 : index
    %9 = vector.load %arg4[%c0_6, %c0_7] : memref<256x256xbf16, #tpu.memory_space<vmem>>, vector<256x256xbf16>
    %cst_8 = arith.constant dense<0.000000e+00> : vector<8x256xf32>
    %10 = tpu.matmul %8, %9, %cst_8 {dimension_numbers = #tpu.dot_dimension_numbers<[1], [0], [0], [1], [0, 0, 1, 1], [], []>} : vector<8x256xbf16>, vector<256x256xbf16>, vector<8x256xf32> -> vector<8x256xf32>
    %c0_9 = arith.constant 0 : index
    %c0_10 = arith.constant 0 : index
    %11 = vector.load %arg5[%c0_9, %c0_10] : memref<1x256xf32, #tpu.memory_space<vmem>>, vector<1x256xf32>
    %12 = vector.broadcast %11 : vector<1x256xf32> to vector<8x256xf32>
    %13 = arith.addf %10, %12 : vector<8x256xf32>
    %cst_11 = arith.constant 0.000000e+00 : f32
    %14 = vector.broadcast %cst_11 : f32 to vector<8x256xf32>
    %15 = arith.maximumf %13, %14 : vector<8x256xf32>
    %16 = arith.truncf %15 : vector<8x256xf32> to vector<8x256xbf16>
    %c0_12 = arith.constant 0 : index
    %c0_13 = arith.constant 0 : index
    %17 = vector.load %arg6[%c0_12, %c0_13] : memref<256x128xbf16, #tpu.memory_space<vmem>>, vector<256x128xbf16>
    %cst_14 = arith.constant dense<0.000000e+00> : vector<8x128xf32>
    %18 = tpu.matmul %16, %17, %cst_14 {dimension_numbers = #tpu.dot_dimension_numbers<[1], [0], [0], [1], [0, 0, 1, 1], [], []>} : vector<8x256xbf16>, vector<256x128xbf16>, vector<8x128xf32> -> vector<8x128xf32>
    %c0_15 = arith.constant 0 : index
    %c0_16 = arith.constant 0 : index
    %19 = vector.load %arg7[%c0_15, %c0_16] : memref<1x128xf32, #tpu.memory_space<vmem>>, vector<1x128xf32>
    %20 = vector.broadcast %19 : vector<1x128xf32> to vector<8x128xf32>
    %21 = arith.addf %18, %20 : vector<8x128xf32>
    %c0_17 = arith.constant 0 : index
    %c0_18 = arith.constant 0 : index
    %22 = vector.load %arg8[%c0_17, %c0_18] : memref<8x128xf32, #tpu.memory_space<vmem>>, vector<8x128xf32>
    tpu.vector_store %arg8[%c0_17, %c0_18], %21 {strides = array<i32>} : memref<8x128xf32, #tpu.memory_space<vmem>>, vector<8x128xf32>,
    return
  }
  func.func @transform_0(%arg0: i32) -> (i32, i32) {
    %c0_i32 = arith.constant 0 : i32
    %c0_i32_0 = arith.constant 0 : i32
    return %arg0, %c0_i32 : i32, i32
  }
  func.func @transform_1(%arg0: i32) -> (i32, i32) {
    %c0_i32 = arith.constant 0 : i32
    %c0_i32_0 = arith.constant 0 : i32
    %c0_i32_1 = arith.constant 0 : i32
    return %c0_i32, %c0_i32_0 : i32, i32
  }
  func.func @transform_2(%arg0: i32) -> (i32, i32) {
    %c0_i32 = arith.constant 0 : i32
    %c0_i32_0 = arith.constant 0 : i32
    %c0_i32_1 = arith.constant 0 : i32
    return %c0_i32, %c0_i32_0 : i32, i32
  }
  func.func @transform_3(%arg0: i32) -> (i32, i32) {
    %c0_i32 = arith.constant 0 : i32
    %c0_i32_0 = arith.constant 0 : i32
    %c0_i32_1 = arith.constant 0 : i32
    return %c0_i32, %c0_i32_0 : i32, i32
  }
  func.func @transform_4(%arg0: i32) -> (i32, i32) {
    %c0_i32 = arith.constant 0 : i32
    %c0_i32_0 = arith.constant 0 : i32
    %c0_i32_1 = arith.constant 0 : i32
    return %c0_i32, %c0_i32_0 : i32, i32
  }
  func.func @transform_5(%arg0: i32) -> (i32, i32) {
    %c0_i32 = arith.constant 0 : i32
    %c0_i32_0 = arith.constant 0 : i32
    %c0_i32_1 = arith.constant 0 : i32
    return %c0_i32, %c0_i32_0 : i32, i32
  }
  func.func @transform_6(%arg0: i32) -> (i32, i32) {
    %c0_i32 = arith.constant 0 : i32
    %c0_i32_0 = arith.constant 0 : i32
    %c0_i32_1 = arith.constant 0 : i32
    return %c0_i32, %c0_i32_0 : i32, i32
  }
  func.func @transform_7(%arg0: i32) -> (i32, i32) {
    %c0_i32 = arith.constant 0 : i32
    %c0_i32_0 = arith.constant 0 : i32
    return %arg0, %c0_i32 : i32, i32
  }
}

</mosaic_0001>

<llo_original>
// kernel: actor_critic_forward.1
$region0: #{actor_critic_forward.1}
  #allocation0 [shape = 'u32[]', space=smem, size = 0x4, offset = 0x4, fixed_abs, tag = 'smem constant byte address 0x4 - core index']
  #allocation1 [shape = 'u32[144,128]{1,0:T(1,128)}', space=vmem, size = 0x12000, scoped, tag = 'internal scratch']
  %s0 = inlined_call_operand.vmem [shape: bf16[8,8], index: 0, kind: input, shape index: {}]
  %s1 = inlined_call_operand.vmem [shape: bf16[8,256], index: 1, kind: input, shape index: {}]
  %s2 = inlined_call_operand.vmem [shape: f32[1,256], index: 2, kind: input, shape index: {}]
  %s3 = inlined_call_operand.hbm [shape: bf16[256,256], index: 3, kind: input, shape index: {}]
  %s4 = inlined_call_operand.vmem [shape: f32[1,256], index: 4, kind: input, shape index: {}]
  %s5 = inlined_call_operand.hbm [shape: bf16[256,128], index: 5, kind: input, shape index: {}]
  %s6 = inlined_call_operand.vmem [shape: f32[1,128], index: 6, kind: input, shape index: {}]
  %s7 = inlined_call_operand.vmem [shape: f32[8,128], index: 7, kind: output, shape index: {}]
  %s8 = sld [smem:[#allocation0]]
  $region46: #{actor_critic_forward.1} parent=0
    _
  %s10 = ssub.s32 1, %s8
  %s11 = scalar_select 0, %s10, %s8
  $region1: #{actor_critic_forward.1} parent=0
    #allocation2 [shape = 'u8[131072]{0}', space=vmem, size = 0x20000, scoped, tag = 'input window, operand 3, single buffered']
    #allocation3 [shape = 's32[1]{0}', space=sflag, size = 0x4, scoped, tag = 'scoped memory for actor_critic_forward.1']
    #allocation4 [shape = 'u8[65536]{0}', space=vmem, size = 0x10000, scoped, tag = 'input window, operand 5, single buffered']
    #allocation5 [shape = 's32[1]{0}', space=sflag, size = 0x4, scoped, tag = 'scoped memory for actor_critic_forward.1']
    %12 = vsyncpa [#allocation3], 0
    %13 = vsyncpa [#allocation5], 0
    // Predicated region
    $region2: #{actor_critic_forward.1} parent=1 // pred_check
      _
    $region3: #{actor_critic_forward.1} parent=1 // pred_check_branch
      %15 = sbr.rel (0) target = $region5
    $region4: #{actor_critic_forward.1} parent=1 // pred_region
      _
    $region5: #{actor_critic_forward.1} parent=1 // pred_fallthru
      _
    // Predicated region
    $region6: #{actor_critic_forward.1} parent=1 // pred_check
      _
    $region7: #{actor_critic_forward.1} parent=1 // pred_check_branch
      %17 = sbr.rel (0) target = $region9
    $region8: #{actor_critic_forward.1} parent=1 // pred_region
      _
    $region9: #{actor_critic_forward.1} parent=1 // pred_fallthru
      _
    // Predicated region
    $region10: #{actor_critic_forward.1} parent=1 // pred_check
      _
    $region11: #{actor_critic_forward.1} parent=1 // pred_check_branch
      %19 = sbr.rel (0) target = $region13
    $region12: #{actor_critic_forward.1} parent=1 // pred_region
      _
    $region13: #{actor_critic_forward.1} parent=1 // pred_fallthru
      _
    // Predicated region
    $region14: #{actor_critic_forward.1} parent=1 // pred_check
      _
    $region15: #{actor_critic_forward.1} parent=1 // pred_check_branch
      %21 = sbr.rel (0) target = $region17
    $region16: #{actor_critic_forward.1} parent=1 // pred_region
      %s23 = ssub.s32 4096, 4096
      %24 = vsyncadd [#allocation3], %s23
      %s25 = sshll.u32 [#allocation2], 4
      %s26 = int_to_ptr.vmem [resolvable:$true] %s25
      %31 = dma.hbm_to_vmem [thread:$0]  %s3, 4096, %s26, [#allocation3], 128, 128, 8
    $region17: #{actor_critic_forward.1} parent=1 // pred_fallthru
      _
    // Predicated region
    $region18: #{actor_critic_forward.1} parent=1 // pred_check
      _
    $region19: #{actor_critic_forward.1} parent=1 // pred_check_branch
      %33 = sbr.rel (0) target = $region21
    $region20: #{actor_critic_forward.1} parent=1 // pred_region
      _
    $region21: #{actor_critic_forward.1} parent=1 // pred_fallthru
      _
    // Predicated region
    $region22: #{actor_critic_forward.1} parent=1 // pred_check
      _
    $region23: #{actor_critic_forward.1} parent=1 // pred_check_branch
      %35 = sbr.rel (0) target = $region25
    $region24: #{actor_critic_forward.1} parent=1 // pred_region
      %s37 = ssub.s32 2048, 2048
      %38 = vsyncadd [#allocation5], %s37
      %s39 = sshll.u32 [#allocation4], 4
      %s40 = int_to_ptr.vmem [resolvable:$true] %s39
      %45 = dma.hbm_to_vmem [thread:$0]  %s5, 2048, %s40, [#allocation5], 64, 64, 4
    $region25: #{actor_critic_forward.1} parent=1 // pred_fallthru
      _
    // Predicated region
    $region26: #{actor_critic_forward.1} parent=1 // pred_check
      _
    $region27: #{actor_critic_forward.1} parent=1 // pred_check_branch
      %47 = sbr.rel (0) target = $region29
    $region28: #{actor_critic_forward.1} parent=1 // pred_region
      _
    $region29: #{actor_critic_forward.1} parent=1 // pred_fallthru
      _
    // Predicated region
    $region30: #{actor_critic_forward.1} parent=1 // pred_check
      _
    $region31: #{actor_critic_forward.1} parent=1 // pred_check_branch
      %49 = sbr.rel (0) target = $region33
    $region32: #{actor_critic_forward.1} parent=1 // pred_region
      %50 = dma.done [#allocation3], 4096
    $region33: #{actor_critic_forward.1} parent=1 // pred_fallthru
      _
    // Predicated region
    $region34: #{actor_critic_forward.1} parent=1 // pred_check
      _
    $region35: #{actor_critic_forward.1} parent=1 // pred_check_branch
      %52 = sbr.rel (0) target = $region37
    $region36: #{actor_critic_forward.1} parent=1 // pred_region
      %53 = dma.done [#allocation5], 2048
    $region37: #{actor_critic_forward.1} parent=1 // pred_fallthru
      _
    %v55 = vld [vmem:[%s0] sm:$0xf]
    %v56 = vld [vmem:[%s1] sm:$0xff]
    %v57 = vld [vmem:[%s2] sm:$0x3]
    %v59 = vlaneseq
    %v60 = vshrl.u32 %v59, 7
    %v61 = vsub.s32 0, %v60
    %v62 = vrot.slane %v57, %v61
    %v63 = vlaneseq
    %v64 = vshrl.u32 %v63, 7
    %v65 = vsub.s32 1, %v64
    %v66 = vrot.slane %v57, %v65
    %v70 = vunpack.c.l.b16 %v56
    %v71 = vunpack.c.h.b16 %v56
    %v72 = vpack.c.b16 %v70, %v70
    %v73 = vpack.c.b16 %v71, %v71
    %vm74 = vcmask 64512
    %v76 = vsel %vm74, %v55, 0
    %vm78 = vcmask 1043456
    %v80 = vsel %vm78, %v72, 0
    %v83 = vsel %vm78, %v73, 0
    %85 = vmatprep.subr.bf16.mxu0 0
    %86 = vmatpush1.bf16.msra.mxu0 0
    %87 = vmatprep.subr.bf16.mxu0 0
    %88 = vmatpush1.bf16.msra.mxu0 0
    %89 = vmatprep.subr.bf16.mxu0 0
    %90 = vmatpush1.bf16.msra.mxu0 0
    %91 = vmatprep.subr.bf16.mxu0 0
    %92 = vmatpush1.bf16.msra.mxu0 0
    %93 = vmatprep.subr.bf16.mxu0 0
    %94 = vmatpush1.bf16.msra.mxu0 0
    %95 = vmatprep.subr.bf16.mxu0 0
    %96 = vmatpush1.bf16.msra.mxu0 0
    %97 = vmatprep.subr.bf16.mxu0 0
    %98 = vmatpush1.bf16.msra.mxu0 0
    %99 = vmatprep.subr.bf16.mxu0 %v83
    %100 = vmatpush1.bf16.msra.mxu0 %v80
    %101 = vmatprep.subr.bf16.mxu0 0
    %102 = vmatpush2.bf16.msra.mxu0 0
    %103 = vmatprep.subr.bf16.mxu0 0
    %104 = vmatpush2.bf16.msra.mxu0 0
    %105 = vmatprep.subr.bf16.mxu0 0
    %106 = vmatpush2.bf16.msra.mxu0 0
    %107 = vmatprep.subr.bf16.mxu0 0
    %108 = vmatpush2.bf16.msra.mxu0 0
    %109 = vmatprep.subr.bf16.mxu0 0
    %110 = vmatpush2.bf16.msra.mxu0 0
    %111 = vmatprep.subr.bf16.mxu0 0
    %112 = vmatpush2.bf16.msra.mxu0 0
    %113 = vmatprep.subr.bf16.mxu0 0
    %114 = vmatpush2.bf16.msra.mxu0 0
    %115 = vmatprep.subr.bf16.mxu0 0
    %116 = vmatpush2.bf16.msra.mxu0 0
    %117 = vmatprep.mubr.bf16.mxu0 0
    %118 = vmatmul.mubr.bf16.gmra.mxu0 %v76
    %v119 = vpop.f32.mrf.mxu0
    %v120 = vadd.f32 %v62, %v119
    %v121 = vpop.f32.mrf.mxu0
    %v122 = vadd.f32 %v66, %v121
    %v123 = vpop.f32.mrf.mxu0
    %v124 = vpop.f32.mrf.mxu0
    %125 = vdwg.mxu0
    %v126 = vmax.f32 %v120, 0.0
    %v127 = vmax.f32 %v122, 0.0
    %v128 = vpack.c.bf16 %v126, %v126
    %v129 = vpack.c.bf16 %v127, %v127
    %v130 = vld [vmem:[#allocation2] sm:$0xff]
    %v131 = vld [vmem:[#allocation2 + $0x8] sm:$0xff]
    %v132 = vld [vmem:[#allocation2 + $0x10] sm:$0xff]
    %v133 = vld [vmem:[#allocation2 + $0x18] sm:$0xff]
    %v134 = vld [vmem:[#allocation2 + $0x20] sm:$0xff]
    %v135 = vld [vmem:[#allocation2 + $0x28] sm:$0xff]
    %v136 = vld [vmem:[#allocation2 + $0x30] sm:$0xff]
    %v137 = vld [vmem:[#allocation2 + $0x38] sm:$0xff]
    %v138 = vld [vmem:[#allocation2 + $0x40] sm:$0xff]
    %v139 = vld [vmem:[#allocation2 + $0x48] sm:$0xff]
    %v140 = vld [vmem:[#allocation2 + $0x50] sm:$0xff]
    %v141 = vld [vmem:[#allocation2 + $0x58] sm:$0xff]
    %v142 = vld [vmem:[#allocation2 + $0x60] sm:$0xff]
    %v143 = vld [vmem:[#allocation2 + $0x68] sm:$0xff]
    %v144 = vld [vmem:[#allocation2 + $0x70] sm:$0xff]
    %v145 = vld [vmem:[#allocation2 + $0x78] sm:$0xff]
    %v146 = vld [vmem:[#allocation2 + $0x80] sm:$0xff]
    %v147 = vld [vmem:[#allocation2 + $0x88] sm:$0xff]
    %v148 = vld [vmem:[#allocation2 + $0x90] sm:$0xff]
    %v149 = vld [vmem:[#allocation2 + $0x98] sm:$0xff]
    %v150 = vld [vmem:[#allocation2 + $0xa0] sm:$0xff]
    %v151 = vld [vmem:[#allocation2 + $0xa8] sm:$0xff]
    %v152 = vld [vmem:[#allocation2 + $0xb0] sm:$0xff]
    %v153 = vld [vmem:[#allocation2 + $0xb8] sm:$0xff]
    %v154 = vld [vmem:[#allocation2 + $0xc0] sm:$0xff]
    %v155 = vld [vmem:[#allocation2 + $0xc8] sm:$0xff]
    %v156 = vld [vmem:[#allocation2 + $0xd0] sm:$0xff]
    %v157 = vld [vmem:[#allocation2 + $0xd8] sm:$0xff]
    %v158 = vld [vmem:[#allocation2 + $0xe0] sm:$0xff]
    %v159 = vld [vmem:[#allocation2 + $0xe8] sm:$0xff]
    %v160 = vld [vmem:[#allocation2 + $0xf0] sm:$0xff]
    %v161 = vld [vmem:[#allocation2 + $0xf8] sm:$0xff]
    %v162 = vld [vmem:[%s4] sm:$0x3]
    %v164 = vlaneseq
    %v165 = vshrl.u32 %v164, 7
    %v166 = vsub.s32 0, %v165
    %v167 = vrot.slane %v162, %v166
    %v168 = vlaneseq
    %v169 = vshrl.u32 %v168, 7
    %v170 = vsub.s32 1, %v169
    %v171 = vrot.slane %v162, %v170
    %v206 = vunpack.c.l.b16 %v130
    %v207 = vunpack.c.h.b16 %v130
    %v208 = vunpack.c.l.b16 %v131
    %v209 = vunpack.c.h.b16 %v131
    %v210 = vunpack.c.l.b16 %v132
    %v211 = vunpack.c.h.b16 %v132
    %v212 = vunpack.c.l.b16 %v133
    %v213 = vunpack.c.h.b16 %v133
    %v214 = vunpack.c.l.b16 %v134
    %v215 = vunpack.c.h.b16 %v134
    %v216 = vunpack.c.l.b16 %v135
    %v217 = vunpack.c.h.b16 %v135
    %v218 = vunpack.c.l.b16 %v136
    %v219 = vunpack.c.h.b16 %v136
    %v220 = vunpack.c.l.b16 %v137
    %v221 = vunpack.c.h.b16 %v137
    %v222 = vunpack.c.l.b16 %v138
    %v223 = vunpack.c.h.b16 %v138
    %v224 = vunpack.c.l.b16 %v139
    %v225 = vunpack.c.h.b16 %v139
    %v226 = vunpack.c.l.b16 %v140
    %v227 = vunpack.c.h.b16 %v140
    %v228 = vunpack.c.l.b16 %v141
    %v229 = vunpack.c.h.b16 %v141
    %v230 = vunpack.c.l.b16 %v142
    %v231 = vunpack.c.h.b16 %v142
    %v232 = vunpack.c.l.b16 %v143
    %v233 = vunpack.c.h.b16 %v143
    %v234 = vunpack.c.l.b16 %v144
    %v235 = vunpack.c.h.b16 %v144
    %v236 = vunpack.c.l.b16 %v145
    %v237 = vunpack.c.h.b16 %v145
    %v238 = vunpack.c.l.b16 %v146
    %v239 = vunpack.c.h.b16 %v146
    %v240 = vunpack.c.l.b16 %v147
    %v241 = vunpack.c.h.b16 %v147
    %v242 = vunpack.c.l.b16 %v148
    %v243 = vunpack.c.h.b16 %v148
    %v244 = vunpack.c.l.b16 %v149
    %v245 = vunpack.c.h.b16 %v149
    %v246 = vunpack.c.l.b16 %v150
    %v247 = vunpack.c.h.b16 %v150
    %v248 = vunpack.c.l.b16 %v151
    %v249 = vunpack.c.h.b16 %v151
    %v250 = vunpack.c.l.b16 %v152
    %v251 = vunpack.c.h.b16 %v152
    %v252 = vunpack.c.l.b16 %v153
    %v253 = vunpack.c.h.b16 %v153
    %v254 = vunpack.c.l.b16 %v154
    %v255 = vunpack.c.h.b16 %v154
    %v256 = vunpack.c.l.b16 %v155
    %v257 = vunpack.c.h.b16 %v155
    %v258 = vunpack.c.l.b16 %v156
    %v259 = vunpack.c.h.b16 %v156
    %v260 = vunpack.c.l.b16 %v157
    %v261 = vunpack.c.h.b16 %v157
    %v262 = vunpack.c.l.b16 %v158
    %v263 = vunpack.c.h.b16 %v158
    %v264 = vunpack.c.l.b16 %v159
    %v265 = vunpack.c.h.b16 %v159
    %v266 = vunpack.c.l.b16 %v160
    %v267 = vunpack.c.h.b16 %v160
    %v268 = vunpack.c.l.b16 %v161
    %v269 = vunpack.c.h.b16 %v161
    %v270 = vpack.c.b16 %v208, %v206
    %v271 = vpack.c.b16 %v209, %v207
    %v272 = vpack.c.b16 %v212, %v210
    %v273 = vpack.c.b16 %v213, %v211
    %v274 = vpack.c.b16 %v216, %v214
    %v275 = vpack.c.b16 %v217, %v215
    %v276 = vpack.c.b16 %v220, %v218
    %v277 = vpack.c.b16 %v221, %v219
    %v278 = vpack.c.b16 %v224, %v222
    %v279 = vpack.c.b16 %v225, %v223
    %v280 = vpack.c.b16 %v228, %v226
    %v281 = vpack.c.b16 %v229, %v227
    %v282 = vpack.c.b16 %v232, %v230
    %v283 = vpack.c.b16 %v233, %v231
    %v284 = vpack.c.b16 %v236, %v234
    %v285 = vpack.c.b16 %v237, %v235
    %v286 = vpack.c.b16 %v240, %v238
    %v287 = vpack.c.b16 %v241, %v239
    %v288 = vpack.c.b16 %v244, %v242
    %v289 = vpack.c.b16 %v245, %v243
    %v290 = vpack.c.b16 %v248, %v246
    %v291 = vpack.c.b16 %v249, %v247
    %v292 = vpack.c.b16 %v252, %v250
    %v293 = vpack.c.b16 %v253, %v251
    %v294 = vpack.c.b16 %v256, %v254
    %v295 = vpack.c.b16 %v257, %v255
    %v296 = vpack.c.b16 %v260, %v258
    %v297 = vpack.c.b16 %v261, %v259
    %v298 = vpack.c.b16 %v264, %v262
    %v299 = vpack.c.b16 %v265, %v263
    %v300 = vpack.c.b16 %v268, %v266
    %v301 = vpack.c.b16 %v269, %v267
    %334 = vmatprep.subr.bf16.mxu0 %v285
    %335 = vmatpush1.bf16.msra.mxu0 %v284
    %336 = vmatprep.subr.bf16.mxu0 %v283
    %337 = vmatpush1.bf16.msra.mxu0 %v282
    %338 = vmatprep.subr.bf16.mxu0 %v281
    %339 = vmatpush1.bf16.msra.mxu0 %v280
    %340 = vmatprep.subr.bf16.mxu0 %v279
    %341 = vmatpush1.bf16.msra.mxu0 %v278
    %342 = vmatprep.subr.bf16.mxu0 %v277
    %343 = vmatpush1.bf16.msra.mxu0 %v276
    %344 = vmatprep.subr.bf16.mxu0 %v275
    %345 = vmatpush1.bf16.msra.mxu0 %v274
    %346 = vmatprep.subr.bf16.mxu0 %v273
    %347 = vmatpush1.bf16.msra.mxu0 %v272
    %348 = vmatprep.subr.bf16.mxu0 %v271
    %349 = vmatpush1.bf16.msra.mxu0 %v270
    %350 = vmatprep.subr.bf16.mxu0 %v301
    %351 = vmatpush2.bf16.msra.mxu0 %v300
    %352 = vmatprep.subr.bf16.mxu0 %v299
    %353 = vmatpush2.bf16.msra.mxu0 %v298
    %354 = vmatprep.subr.bf16.mxu0 %v297
    %355 = vmatpush2.bf16.msra.mxu0 %v296
    %356 = vmatprep.subr.bf16.mxu0 %v295
    %357 = vmatpush2.bf16.msra.mxu0 %v294
    %358 = vmatprep.subr.bf16.mxu0 %v293
    %359 = vmatpush2.bf16.msra.mxu0 %v292
    %360 = vmatprep.subr.bf16.mxu0 %v291
    %361 = vmatpush2.bf16.msra.mxu0 %v290
    %362 = vmatprep.subr.bf16.mxu0 %v289
    %363 = vmatpush2.bf16.msra.mxu0 %v288
    %364 = vmatprep.subr.bf16.mxu0 %v287
    %365 = vmatpush2.bf16.msra.mxu0 %v286
    %366 = vmatprep.mubr.bf16.mxu0 %v129
    %367 = vmatmul.mubr.bf16.gmra.mxu0 %v128
    %v368 = vpop.f32.mrf.mxu0
    %v369 = vadd.f32 %v167, %v368
    %v370 = vpop.f32.mrf.mxu0
    %v371 = vadd.f32 %v171, %v370
    %v372 = vpop.f32.mrf.mxu0
    %v373 = vpop.f32.mrf.mxu0
    %374 = vdwg.mxu0
    %v375 = vmax.f32 %v369, 0.0
    %v376 = vmax.f32 %v371, 0.0
    %v377 = vpack.c.bf16 %v375, %v375
    %v378 = vpack.c.bf16 %v376, %v376
    %v379 = vld [vmem:[#allocation4] sm:$0xf]
    %v380 = vld [vmem:[#allocation4 + $0x4] sm:$0xf]
    %v381 = vld [vmem:[#allocation4 + $0x8] sm:$0xf]
    %v382 = vld [vmem:[#allocation4 + $0xc] sm:$0xf]
    %v383 = vld [vmem:[#allocation4 + $0x10] sm:$0xf]
    %v384 = vld [vmem:[#allocation4 + $0x14] sm:$0xf]
    %v385 = vld [vmem:[#allocation4 + $0x18] sm:$0xf]
    %v386 = vld [vmem:[#allocation4 + $0x1c] sm:$0xf]
    %v387 = vld [vmem:[#allocation4 + $0x20] sm:$0xf]
    %v388 = vld [vmem:[#allocation4 + $0x24] sm:$0xf]
    %v389 = vld [vmem:[#allocation4 + $0x28] sm:$0xf]
    %v390 = vld [vmem:[#allocation4 + $0x2c] sm:$0xf]
    %v391 = vld [vmem:[#allocation4 + $0x30] sm:$0xf]
    %v392 = vld [vmem:[#allocation4 + $0x34] sm:$0xf]
    %v393 = vld [vmem:[#allocation4 + $0x38] sm:$0xf]
    %v394 = vld [vmem:[#allocation4 + $0x3c] sm:$0xf]
    %v395 = vld [vmem:[#allocation4 + $0x40] sm:$0xf]
    %v396 = vld [vmem:[#allocation4 + $0x44] sm:$0xf]
    %v397 = vld [vmem:[#allocation4 + $0x48] sm:$0xf]
    %v398 = vld [vmem:[#allocation4 + $0x4c] sm:$0xf]
    %v399 = vld [vmem:[#allocation4 + $0x50] sm:$0xf]
    %v400 = vld [vmem:[#allocation4 + $0x54] sm:$0xf]
    %v401 = vld [vmem:[#allocation4 + $0x58] sm:$0xf]
    %v402 = vld [vmem:[#allocation4 + $0x5c] sm:$0xf]
    %v403 = vld [vmem:[#allocation4 + $0x60] sm:$0xf]
    %v404 = vld [vmem:[#allocation4 + $0x64] sm:$0xf]
    %v405 = vld [vmem:[#allocation4 + $0x68] sm:$0xf]
    %v406 = vld [vmem:[#allocation4 + $0x6c] sm:$0xf]
    %v407 = vld [vmem:[#allocation4 + $0x70] sm:$0xf]
    %v408 = vld [vmem:[#allocation4 + $0x74] sm:$0xf]
    %v409 = vld [vmem:[#allocation4 + $0x78] sm:$0xf]
    %v410 = vld [vmem:[#allocation4 + $0x7c] sm:$0xf]
    %v411 = vld [vmem:[%s6] sm:$0x1]
    %v413 = vlaneseq
    %v414 = vshrl.u32 %v413, 7
    %v415 = vsub.s32 0, %v414
    %v416 = vrot.slane %v411, %v415
    %v450 = vunpack.c.l.b16 %v379
    %v451 = vunpack.c.l.b16 %v380
    %v452 = vunpack.c.l.b16 %v381
    %v453 = vunpack.c.l.b16 %v382
    %v454 = vunpack.c.l.b16 %v383
    %v455 = vunpack.c.l.b16 %v384
    %v456 = vunpack.c.l.b16 %v385
    %v457 = vunpack.c.l.b16 %v386
    %v458 = vunpack.c.l.b16 %v387
    %v459 = vunpack.c.l.b16 %v388
    %v460 = vunpack.c.l.b16 %v389
    %v461 = vunpack.c.l.b16 %v390
    %v462 = vunpack.c.l.b16 %v391
    %v463 = vunpack.c.l.b16 %v392
    %v464 = vunpack.c.l.b16 %v393
    %v465 = vunpack.c.l.b16 %v394
    %v466 = vunpack.c.l.b16 %v395
    %v467 = vunpack.c.l.b16 %v396
    %v468 = vunpack.c.l.b16 %v397
    %v469 = vunpack.c.l.b16 %v398
    %v470 = vunpack.c.l.b16 %v399
    %v471 = vunpack.c.l.b16 %v400
    %v472 = vunpack.c.l.b16 %v401
    %v473 = vunpack.c.l.b16 %v402
    %v474 = vunpack.c.l.b16 %v403
    %v475 = vunpack.c.l.b16 %v404
    %v476 = vunpack.c.l.b16 %v405
    %v477 = vunpack.c.l.b16 %v406
    %v478 = vunpack.c.l.b16 %v407
    %v479 = vunpack.c.l.b16 %v408
    %v480 = vunpack.c.l.b16 %v409
    %v481 = vunpack.c.l.b16 %v410
    %v482 = vpack.c.b16 %v451, %v450
    %v483 = vpack.c.b16 %v453, %v452
    %v484 = vpack.c.b16 %v455, %v454
    %v485 = vpack.c.b16 %v457, %v456
    %v486 = vpack.c.b16 %v459, %v458
    %v487 = vpack.c.b16 %v461, %v460
    %v488 = vpack.c.b16 %v463, %v462
    %v489 = vpack.c.b16 %v465, %v464
    %v490 = vpack.c.b16 %v467, %v466
    %v491 = vpack.c.b16 %v469, %v468
    %v492 = vpack.c.b16 %v471, %v470
    %v493 = vpack.c.b16 %v473, %v472
    %v494 = vpack.c.b16 %v475, %v474
    %v495 = vpack.c.b16 %v477, %v476
    %v496 = vpack.c.b16 %v479, %v478
    %v497 = vpack.c.b16 %v481, %v480
    %514 = vmatprep.subr.bf16.mxu0 0
    %515 = vmatpush1.bf16.msra.mxu0 %v489
    %516 = vmatprep.subr.bf16.mxu0 0
    %517 = vmatpush1.bf16.msra.mxu0 %v488
    %518 = vmatprep.subr.bf16.mxu0 0
    %519 = vmatpush1.bf16.msra.mxu0 %v487
    %520 = vmatprep.subr.bf16.mxu0 0
    %521 = vmatpush1.bf16.msra.mxu0 %v486
    %522 = vmatprep.subr.bf16.mxu0 0
    %523 = vmatpush1.bf16.msra.mxu0 %v485
    %524 = vmatprep.subr.bf16.mxu0 0
    %525 = vmatpush1.bf16.msra.mxu0 %v484
    %526 = vmatprep.subr.bf16.mxu0 0
    %527 = vmatpush1.bf16.msra.mxu0 %v483
    %528 = vmatprep.subr.bf16.mxu0 0
    %529 = vmatpush1.bf16.msra.mxu0 %v482
    %530 = vmatprep.subr.bf16.mxu0 0
    %531 = vmatpush2.bf16.msra.mxu0 %v497
    %532 = vmatprep.subr.bf16.mxu0 0
    %533 = vmatpush2.bf16.msra.mxu0 %v496
    %534 = vmatprep.subr.bf16.mxu0 0
    %535 = vmatpush2.bf16.msra.mxu0 %v495
    %536 = vmatprep.subr.bf16.mxu0 0
    %537 = vmatpush2.bf16.msra.mxu0 %v494
    %538 = vmatprep.subr.bf16.mxu0 0
    %539 = vmatpush2.bf16.msra.mxu0 %v493
    %540 = vmatprep.subr.bf16.mxu0 0
    %541 = vmatpush2.bf16.msra.mxu0 %v492
    %542 = vmatprep.subr.bf16.mxu0 0
    %543 = vmatpush2.bf16.msra.mxu0 %v491
    %544 = vmatprep.subr.bf16.mxu0 0
    %545 = vmatpush2.bf16.msra.mxu0 %v490
    %546 = vmatprep.mubr.bf16.mxu0 %v378
    %547 = vmatmul.mubr.bf16.gmra.mxu0 %v377
    %v548 = vpop.f32.mrf.mxu0
    %v549 = vadd.f32 %v416, %v548
    %v550 = vpop.f32.mrf.mxu0
    %v551 = vpop.f32.mrf.mxu0
    %v552 = vpop.f32.mrf.mxu0
    %553 = vdwg.mxu0
    %554 = vst [vmem:[%s7] sm:$0xff] %v549
    // Predicated region
    $region38: #{actor_critic_forward.1} parent=1 // pred_check
      _
    $region39: #{actor_critic_forward.1} parent=1 // pred_check_branch
      %556 = sbr.rel (0) target = $region41
    $region40: #{actor_critic_forward.1} parent=1 // pred_region
      _
    $region41: #{actor_critic_forward.1} parent=1 // pred_fallthru
      _
    // Predicated region
    $region42: #{actor_critic_forward.1} parent=1 // pred_check
      _
    $region43: #{actor_critic_forward.1} parent=1 // pred_check_branch
      %558 = sbr.rel (0) target = $region45
    $region44: #{actor_critic_forward.1} parent=1 // pred_region
      _
    $region45: #{actor_critic_forward.1} parent=1 // pred_fallthru
      _
    %559 = vsyncpa [#allocation3], 1
    %560 = vsyncpa [#allocation5], 1

</llo_original>
